<compile_context>
chip_gen: v7x
topology: tpu7x:2x2x1
jax: 0.10.0
libtpu: 0.0.40
codegen_flags: <defaults>
</compile_context>

<pallas_src>
import functools

import jax
import jax.numpy as jnp
from jax import lax
from jax.experimental import pallas as pl
from jax.experimental.pallas import tpu as pltpu


H1 = 128       # hidden 1 width
H2 = 64        # hidden 2 width (logical, from the PyTorch module)
H2_PAD = 128   # hidden 2 width padded to a full 128-lane vreg

_K_GRANULE = 2048                       # vocab padding granule for the K-tiled path
_VMEM_BUDGET = 40 * 1024 * 1024         # target working set (fits v7x's 64 MiB physical)
_VMEM_LIMIT_BYTES = 48 * 1024 * 1024    # scoped VMEM limit handed to Mosaic
_SMALL_WEIGHTS_BYTES = 2 * (H1 * 4 + H1 * H2_PAD * 2 + 2 * H2_PAD * 4 + 4)


def _round_up(n, m):
    return ((n + m - 1) // m) * m


def _resident_vmem_bytes(tb, d):
    """Conservative VMEM estimate for the resident-w1 path (2 buffers per spec)."""
    x_tiles = 2 * tb * d * 4            # streamed f32 x tiles (double-buffered)
    x_cast = tb * d * 2                 # in-kernel bf16 copy of the x tile
    w1_res = 2 * d * H1 * 2             # bf16 w1 (counted double-buffered to be safe)
    out_tile = 2 * tb * 4
    interm = 4 * tb * H1 * 4            # h1 / h2 temporaries + headroom
    return x_tiles + x_cast + w1_res + out_tile + interm + _SMALL_WEIGHTS_BYTES


def _ktiled_vmem_bytes(tb, tk):
    """Conservative VMEM estimate for the K-tiled fallback path."""
    return (2 * tb * tk * 4 + tb * tk * 2 + 2 * tk * H1 * 2
            + tb * H1 * 4 + 2 * tb * 4 + 3 * tb * H1 * 4 + _SMALL_WEIGHTS_BYTES)


def _mlp_tail(h1_pre, b1_ref, w2_ref, b2_ref, w3_ref, b3_ref):
    """bias+ReLU -> layer2 -> ReLU -> layer3 -> sigmoid; returns a (1, tb) row."""
    # Dropout(0.5) layers are identity in eval-mode forward.
    h1 = jnp.maximum(h1_pre + b1_ref[...], 0.0)
    # Layer 2: [tb,128](bf16) @ [128,128](bf16, zero-padded 64->128 cols) -> f32.
    h2 = jnp.dot(h1.astype(jnp.bfloat16), w2_ref[...],
                 preferred_element_type=jnp.float32)
    h2 = jnp.maximum(h2 + b2_ref[...], 0.0)
    # Layer 3 (single output): contract the two 128-lane dims so the result is a
    # lane-dense (1, tb) row directly (no relayout / masked 1-lane stores).
    z = lax.dot_general(w3_ref[...], h2, (((1,), (1,)), ((), ())),
                        preferred_element_type=jnp.float32) + b3_ref[...]
    return 1.0 / (1.0 + jnp.exp(-z))


def fnn_resident_kernel(x_ref, w1_ref, b1_ref, w2_ref, b2_ref, w3_ref, b3_ref,
                        o_ref):
    # Layer 1: whole vocab contracted in one MXU call; f32 x tile is cast to
    # bf16 on the fly (the cast hides under the next tile's DMA).
    h1_pre = jnp.dot(x_ref[...].astype(jnp.bfloat16), w1_ref[...],
                     preferred_element_type=jnp.float32)
    o_ref[...] = _mlp_tail(h1_pre, b1_ref, w2_ref, b2_ref, w3_ref,
                           b3_ref).astype(o_ref.dtype)


def fnn_ktiled_kernel(x_ref, w1_ref, b1_ref, w2_ref, b2_ref, w3_ref, b3_ref,
                      o_ref, acc_ref):
    k = pl.program_id(1)

    @pl.when(k == 0)
    def _():
        acc_ref[...] = jnp.zeros_like(acc_ref)

    acc_ref[...] += jnp.dot(x_ref[...].astype(jnp.bfloat16), w1_ref[...],
                            preferred_element_type=jnp.float32)

    @pl.when(k == pl.num_programs(1) - 1)
    def _():
        o_ref[...] = _mlp_tail(acc_ref[...], b1_ref, w2_ref, b2_ref, w3_ref,
                               b3_ref).astype(o_ref.dtype)


def prepare_params(params, force_ktiled=False):
    """One-time weight preparation (padding + bf16 casts), hoisted out of forward.

    Weights are stored as [in_features, out_features] (transpose of
    nn.Linear.weight).  Hidden-2 is zero-padded 64 -> 128 lanes (exact: padded
    b2 / w3 entries are zero so they contribute nothing).
    """
    w1_f32 = jnp.asarray(params["w1"], jnp.float32)
    d = w1_f32.shape[0]
    if (not force_ktiled) and _resident_vmem_bytes(128, d) <= _VMEM_BUDGET:
        w1 = w1_f32.astype(jnp.bfloat16)                         # resident path
    else:
        d_pad = _round_up(d, _K_GRANULE)                          # K-tiled path
        w1 = jnp.zeros((d_pad, H1), jnp.bfloat16).at[:d, :].set(
            w1_f32.astype(jnp.bfloat16))
    b1 = jnp.asarray(params["b1"], jnp.float32).reshape(1, H1)
    w2 = jnp.zeros((H1, H2_PAD), jnp.float32).at[:, :H2].set(
        jnp.asarray(params["w2"], jnp.float32)).astype(jnp.bfloat16)
    b2 = jnp.zeros((1, H2_PAD), jnp.float32).at[:, :H2].set(
        jnp.asarray(params["b2"], jnp.float32).reshape(1, H2))
    w3 = jnp.zeros((1, H2_PAD), jnp.float32).at[:, :H2].set(
        jnp.asarray(params["w3"], jnp.float32).reshape(1, H2))
    b3 = jnp.asarray(params["b3"], jnp.float32).reshape(1, 1)
    return {"w1": w1, "b1": b1, "w2": w2, "b2": b2, "w3": w3, "b3": b3}


def _pick_batch_tile(batch, tb_req, d, resident):
    b16 = _round_up(max(batch, 1), 16)
    tb_eff = _round_up(min(max(tb_req, 16), b16), 16)
    # v7x has 2 TensorCores: prefer >=2 batch tiles once each can be >=128 rows.
    if b16 >= 256:
        tb_eff = min(tb_eff, _round_up((b16 + 1) // 2, 128))
    if resident:
        # Shrink the batch tile until the resident working set fits the budget
        # (the x tile scales with the full vocab width in this path).
        while tb_eff > 128 and _resident_vmem_bytes(tb_eff, d) > _VMEM_BUDGET:
            tb_eff = max(128, _round_up(tb_eff // 2, 16))
    b_pad = _round_up(max(batch, 1), tb_eff)
    # Lane-dense (1, tb) output blocks need tb % 128 == 0 when there are >1 tiles.
    if b_pad > tb_eff and tb_eff % 128 != 0:
        tb_eff = _round_up(tb_eff, 128)
        b_pad = _round_up(max(batch, 1), tb_eff)
    return tb_eff, b_pad


@functools.partial(jax.jit, static_argnames=("tb", "tk"))
def sentiment_fnn_forward(x, prepared, *, tb=256, tk=None):
    """x: [B, input_dim] float32; prepared: output of prepare_params()."""
    x = jnp.asarray(x, jnp.float32)
    batch, d = x.shape
    w1, b1, w2 = prepared["w1"], prepared["b1"], prepared["w2"]
    b2, w3, b3 = prepared["b2"], prepared["w3"], prepared["b3"]
    d_w1 = w1.shape[0]
    assert d_w1 >= d, "prepared w1 has fewer input features than x"

    resident = (d_w1 == d) and (_resident_vmem_bytes(128, d) <= _VMEM_BUDGET)
    tb_eff, b_pad = _pick_batch_tile(batch, tb, d, resident)
    compiler_params = pltpu.CompilerParams
    common_small_specs = [
        pl.BlockSpec((1, H1), lambda *a: (0, 0)),        # b1 (VMEM resident)
        pl.BlockSpec((H1, H2_PAD), lambda *a: (0, 0)),   # w2 (resident)
        pl.BlockSpec((1, H2_PAD), lambda *a: (0, 0)),    # b2 (resident)
        pl.BlockSpec((1, H2_PAD), lambda *a: (0, 0)),    # w3 row (resident)
        pl.BlockSpec((1, 1), lambda *a: (0, 0)),         # b3 (resident)
    ]

    if resident:
        # --- Resident-w1 path: single K step, w1 lives in VMEM for the whole grid.
        x_p = x if b_pad == batch else jnp.pad(x, ((0, b_pad - batch), (0, 0)))
        grid = (b_pad // tb_eff,)
        out = pl.pallas_call(
            fnn_resident_kernel,
            out_shape=jax.ShapeDtypeStruct((1, b_pad), jnp.float32),
            grid_spec=pltpu.PrefetchScalarGridSpec(
                num_scalar_prefetch=0,
                grid=grid,
                in_specs=[
                    pl.BlockSpec((tb_eff, d), lambda i: (i, 0)),   # x tile (f32)
                    pl.BlockSpec((d, H1), lambda i: (0, 0)),       # w1 (resident)
                ] + common_small_specs,
                out_specs=pl.BlockSpec((1, tb_eff), lambda i: (0, i)),
            ),
            compiler_params=compiler_params(
                dimension_semantics=("parallel",),
                vmem_limit_bytes=_VMEM_LIMIT_BYTES,
            ),
        )(x_p, w1, b1, w2, b2, w3, b3)
    else:
        # --- K-tiled fallback for very large vocabularies (w1 streamed in K tiles).
        d_pad = d_w1
        tk_cap = tk if tk is not None else 8192
        tk_eff = _K_GRANULE
        for cand in (8192, 4096, 2048):
            if (cand <= tk_cap and d_pad % cand == 0
                    and _ktiled_vmem_bytes(tb_eff, cand) <= _VMEM_BUDGET):
                tk_eff = cand
                break
        # Per-call padded f32 copy of x is only paid on this huge-vocab path.
        x_p = jnp.pad(x, ((0, b_pad - batch), (0, d_pad - d)))
        grid = (b_pad // tb_eff, d_pad // tk_eff)
        out = pl.pallas_call(
            fnn_ktiled_kernel,
            out_shape=jax.ShapeDtypeStruct((1, b_pad), jnp.float32),
            grid_spec=pltpu.PrefetchScalarGridSpec(
                num_scalar_prefetch=0,
                grid=grid,
                in_specs=[
                    pl.BlockSpec((tb_eff, tk_eff), lambda i, k: (i, k)),  # x tile
                    pl.BlockSpec((tk_eff, H1), lambda i, k: (k, 0)),      # w1 tile
                ] + common_small_specs,
                out_specs=pl.BlockSpec((1, tb_eff), lambda i, k: (0, i)),
                scratch_shapes=[pltpu.VMEM((tb_eff, H1), jnp.float32)],
            ),
            compiler_params=compiler_params(
                dimension_semantics=("parallel", "arbitrary"),
                vmem_limit_bytes=_VMEM_LIMIT_BYTES,
            ),
        )(x_p, w1, b1, w2, b2, w3, b3)

    return out[0, :batch][:, None]


def init_params(key, input_dim):
    """Deterministic PyTorch-style (Kaiming-uniform-ish) init; weights stored as
    [in_features, out_features] (transpose of nn.Linear.weight)."""
    k1, k2, k3, k4, k5, k6 = jax.random.split(key, 6)

    def lin(kw, kb, fan_in, fan_out):
        bound = 1.0 / jnp.sqrt(fan_in)
        w = jax.random.uniform(kw, (fan_in, fan_out), jnp.float32, -bound, bound)
        b = jax.random.uniform(kb, (1, fan_out), jnp.float32, -bound, bound)
        return w, b

    w1, b1 = lin(k1, k2, input_dim, H1)
    w2, b2 = lin(k3, k4, H1, H2)
    w3, b3 = lin(k5, k6, H2, 1)
    return {"w1": w1, "b1": b1, "w2": w2, "b2": b2, "w3": w3, "b3": b3}


def reference_forward(x, params, match_bf16=True):
    if match_bf16:
        bf = jnp.bfloat16
        h1 = jnp.maximum(jnp.dot(x.astype(bf), params["w1"].astype(bf),
                                 preferred_element_type=jnp.float32)
                         + params["b1"], 0.0)
        h2 = jnp.maximum(jnp.dot(h1.astype(bf), params["w2"].astype(bf),
                                 preferred_element_type=jnp.float32)
                         + params["b2"], 0.0)
    else:
        h1 = jnp.maximum(x @ params["w1"] + params["b1"], 0.0)
        h2 = jnp.maximum(h1 @ params["w2"] + params["b2"], 0.0)
    return 1.0 / (1.0 + jnp.exp(-(h2 @ params["w3"] + params["b3"])))


if __name__ == "__main__":
    key = jax.random.PRNGKey(0)
    kx1, kp1, kx2, kp2 = jax.random.split(key, 4)

    # --- Path 1: VMEM-resident w1 (typical TF-IDF vocab sizes). ---
    D1, B1 = 512, 16
    x1 = jax.random.uniform(kx1, (B1, D1), jnp.float32)   # TF-IDF features >= 0
    params1 = init_params(kp1, D1)
    prep1 = prepare_params(params1)
    out1 = jax.block_until_ready(sentiment_fnn_forward(x1, prep1))
    assert out1.shape == (B1, 1)
    ref1 = reference_forward(x1, params1, match_bf16=True)
    assert jnp.allclose(out1, ref1, atol=2e-3, rtol=2e-3), float(
        jnp.max(jnp.abs(out1 - ref1)))
    # Coarse check against the full-f32 reference (bounds the bf16 input error).
    reff = reference_forward(x1, params1, match_bf16=False)
    assert jnp.allclose(out1, reff, atol=2e-2, rtol=2e-2)

    # --- Path 2: K-tiled fallback (huge-vocab path), forced at a small shape. ---
    D2, B2 = 2304, 16
    x2 = jax.random.uniform(kx2, (B2, D2), jnp.float32)
    params2 = init_params(kp2, D2)
    prep2 = prepare_params(params2, force_ktiled=True)
    out2 = jax.block_until_ready(sentiment_fnn_forward(x2, prep2, tk=2048))  # 2 K steps
    assert out2.shape == (B2, 1)
    ref2 = reference_forward(x2, params2, match_bf16=True)
    assert jnp.allclose(out2, ref2, atol=2e-3, rtol=2e-3), float(
        jnp.max(jnp.abs(out2 - ref2)))

    print("KERNEL_OK")
</pallas_src>

<mosaic_0001>
module attributes {stable_mosaic.version = 11 : i64} {
  func.func @fnn_resident_kernel(%arg0: i32, %arg1: memref<16x512xf32, #tpu.memory_space<vmem>>, %arg2: memref<512x128xbf16, #tpu.memory_space<vmem>>, %arg3: memref<1x128xf32, #tpu.memory_space<vmem>>, %arg4: memref<128x128xbf16, #tpu.memory_space<vmem>>, %arg5: memref<1x128xf32, #tpu.memory_space<vmem>>, %arg6: memref<1x128xf32, #tpu.memory_space<vmem>>, %arg7: memref<1x1xf32, #tpu.memory_space<vmem>>, %arg8: memref<1x16xf32, #tpu.memory_space<vmem>>) attributes {dimension_semantics = [#tpu.dimension_semantics<parallel>], iteration_bounds = array<i64: 1>, scalar_prefetch = 0 : i64, scratch_operands = 0 : i64, tpu.core_type = #tpu.core_type<tc>, window_params = [{transform_indices = @transform_0, window_bounds = array<i64: 16, 512>}, {pipeline_mode = #tpu.pipeline_mode<synchronous>, transform_indices = @transform_1, window_bounds = array<i64: 512, 128>}, {pipeline_mode = #tpu.pipeline_mode<synchronous>, transform_indices = @transform_2, window_bounds = array<i64: 1, 128>}, {pipeline_mode = #tpu.pipeline_mode<synchronous>, transform_indices = @transform_3, window_bounds = array<i64: 128, 128>}, {pipeline_mode = #tpu.pipeline_mode<synchronous>, transform_indices = @transform_4, window_bounds = array<i64: 1, 128>}, {pipeline_mode = #tpu.pipeline_mode<synchronous>, transform_indices = @transform_5, window_bounds = array<i64: 1, 128>}, {pipeline_mode = #tpu.pipeline_mode<synchronous>, transform_indices = @transform_6, window_bounds = array<i64: 1, 1>}, {transform_indices = @transform_7, window_bounds = array<i64: 1, 16>}]} {
    %c0 = arith.constant 0 : index
    %c0_0 = arith.constant 0 : index
    %0 = vector.load %arg1[%c0, %c0_0] : memref<16x512xf32, #tpu.memory_space<vmem>>, vector<16x512xf32>
    %1 = arith.truncf %0 : vector<16x512xf32> to vector<16x512xbf16>
    %c0_1 = arith.constant 0 : index
    %c0_2 = arith.constant 0 : index
    %2 = vector.load %arg2[%c0_1, %c0_2] : memref<512x128xbf16, #tpu.memory_space<vmem>>, vector<512x128xbf16>
    %cst = arith.constant dense<0.000000e+00> : vector<16x128xf32>
    %3 = tpu.matmul %1, %2, %cst {dimension_numbers = #tpu.dot_dimension_numbers<[1], [0], [0], [1], [0, 0, 1, 1], [], []>} : vector<16x512xbf16>, vector<512x128xbf16>, vector<16x128xf32> -> vector<16x128xf32>
    %c0_3 = arith.constant 0 : index
    %c0_4 = arith.constant 0 : index
    %4 = vector.load %arg3[%c0_3, %c0_4] : memref<1x128xf32, #tpu.memory_space<vmem>>, vector<1x128xf32>
    %5 = vector.broadcast %4 : vector<1x128xf32> to vector<16x128xf32>
    %6 = arith.addf %3, %5 : vector<16x128xf32>
    %cst_5 = arith.constant 0.000000e+00 : f32
    %7 = vector.broadcast %cst_5 : f32 to vector<16x128xf32>
    %8 = arith.maximumf %6, %7 : vector<16x128xf32>
    %9 = arith.truncf %8 : vector<16x128xf32> to vector<16x128xbf16>
    %c0_6 = arith.constant 0 : index
    %c0_7 = arith.constant 0 : index
    %10 = vector.load %arg4[%c0_6, %c0_7] : memref<128x128xbf16, #tpu.memory_space<vmem>>, vector<128x128xbf16>
    %cst_8 = arith.constant dense<0.000000e+00> : vector<16x128xf32>
    %11 = tpu.matmul %9, %10, %cst_8 {dimension_numbers = #tpu.dot_dimension_numbers<[1], [0], [0], [1], [0, 0, 1, 1], [], []>} : vector<16x128xbf16>, vector<128x128xbf16>, vector<16x128xf32> -> vector<16x128xf32>
    %c0_9 = arith.constant 0 : index
    %c0_10 = arith.constant 0 : index
    %12 = vector.load %arg5[%c0_9, %c0_10] : memref<1x128xf32, #tpu.memory_space<vmem>>, vector<1x128xf32>
    %13 = vector.broadcast %12 : vector<1x128xf32> to vector<16x128xf32>
    %14 = arith.addf %11, %13 : vector<16x128xf32>
    %cst_11 = arith.constant 0.000000e+00 : f32
    %15 = vector.broadcast %cst_11 : f32 to vector<16x128xf32>
    %16 = arith.maximumf %14, %15 : vector<16x128xf32>
    %c0_12 = arith.constant 0 : index
    %c0_13 = arith.constant 0 : index
    %17 = vector.load %arg6[%c0_12, %c0_13] : memref<1x128xf32, #tpu.memory_space<vmem>>, vector<1x128xf32>
    %cst_14 = arith.constant dense<0.000000e+00> : vector<1x16xf32>
    %18 = tpu.matmul %17, %16, %cst_14 {dimension_numbers = #tpu.dot_dimension_numbers<[1], [1], [0], [0], [0, 0, 1, 0], [], []>} : vector<1x128xf32>, vector<16x128xf32>, vector<1x16xf32> -> vector<1x16xf32>
    %c0_15 = arith.constant 0 : index
    %c0_16 = arith.constant 0 : index
    %19 = vector.load %arg7[%c0_15, %c0_16] : memref<1x1xf32, #tpu.memory_space<vmem>>, vector<1x1xf32>
    %20 = vector.broadcast %19 : vector<1x1xf32> to vector<1x16xf32>
    %21 = arith.addf %18, %20 : vector<1x16xf32>
    %cst_17 = arith.constant 0.000000e+00 : f32
    %22 = vector.broadcast %cst_17 : f32 to vector<1x16xf32>
    %23 = arith.subf %22, %21 : vector<1x16xf32>
    %24 = math.exp %23 : vector<1x16xf32>
    %cst_18 = arith.constant 1.000000e+00 : f32
    %25 = vector.broadcast %cst_18 : f32 to vector<1x16xf32>
    %26 = arith.addf %25, %24 : vector<1x16xf32>
    %cst_19 = arith.constant 1.000000e+00 : f32
    %27 = vector.broadcast %cst_19 : f32 to vector<1x16xf32>
    %28 = arith.divf %27, %26 : vector<1x16xf32>
    %c0_20 = arith.constant 0 : index
    %c0_21 = arith.constant 0 : index
    %29 = vector.load %arg8[%c0_20, %c0_21] : memref<1x16xf32, #tpu.memory_space<vmem>>, vector<1x16xf32>
    tpu.vector_store %arg8[%c0_20, %c0_21], %28 {strides = array<i32>} : memref<1x16xf32, #tpu.memory_space<vmem>>, vector<1x16xf32>,
    return
  }
  func.func @transform_0(%arg0: i32) -> (i32, i32) {
    %c0_i32 = arith.constant 0 : i32
    %c0_i32_0 = arith.constant 0 : i32
    return %arg0, %c0_i32 : i32, i32
  }
  func.func @transform_1(%arg0: i32) -> (i32, i32) {
    %c0_i32 = arith.constant 0 : i32
    %c0_i32_0 = arith.constant 0 : i32
    %c0_i32_1 = arith.constant 0 : i32
    return %c0_i32, %c0_i32_0 : i32, i32
  }
  func.func @transform_2(%arg0: i32) -> (i32, i32) {
    %c0_i32 = arith.constant 0 : i32
    %c0_i32_0 = arith.constant 0 : i32
    %c0_i32_1 = arith.constant 0 : i32
    return %c0_i32, %c0_i32_0 : i32, i32
  }
  func.func @transform_3(%arg0: i32) -> (i32, i32) {
    %c0_i32 = arith.constant 0 : i32
    %c0_i32_0 = arith.constant 0 : i32
    %c0_i32_1 = arith.constant 0 : i32
    return %c0_i32, %c0_i32_0 : i32, i32
  }
  func.func @transform_4(%arg0: i32) -> (i32, i32) {
    %c0_i32 = arith.constant 0 : i32
    %c0_i32_0 = arith.constant 0 : i32
    %c0_i32_1 = arith.constant 0 : i32
    return %c0_i32, %c0_i32_0 : i32, i32
  }
  func.func @transform_5(%arg0: i32) -> (i32, i32) {
    %c0_i32 = arith.constant 0 : i32
    %c0_i32_0 = arith.constant 0 : i32
    %c0_i32_1 = arith.constant 0 : i32
    return %c0_i32, %c0_i32_0 : i32, i32
  }
  func.func @transform_6(%arg0: i32) -> (i32, i32) {
    %c0_i32 = arith.constant 0 : i32
    %c0_i32_0 = arith.constant 0 : i32
    %c0_i32_1 = arith.constant 0 : i32
    return %c0_i32, %c0_i32_0 : i32, i32
  }
  func.func @transform_7(%arg0: i32) -> (i32, i32) {
    %c0_i32 = arith.constant 0 : i32
    %c0_i32_0 = arith.constant 0 : i32
    return %c0_i32, %arg0 : i32, i32
  }
}

</mosaic_0001>

<llo_original>
// kernel: sentiment_fnn_forward.1
$region0: #{sentiment_fnn_forward.1}
  #allocation0 [shape = 'u32[]', space=smem, size = 0x4, offset = 0x4, fixed_abs, tag = 'smem constant byte address 0x4 - core index']
  #allocation1 [shape = 'u32[144,128]{1,0:T(1,128)}', space=vmem, size = 0x12000, scoped, tag = 'internal scratch']
  #allocation2 [shape = 'f32[1,1]{1,0:T(1,128)S(1)}', space=vmem, size = 0x200, scoped, tag = 'scoped memory for sentiment_fnn_forward.1']
  %s0 = inlined_call_operand.hbm [shape: f32[16,512], index: 0, kind: input, shape index: {}]
  %s1 = inlined_call_operand.hbm [shape: bf16[512,128], index: 1, kind: input, shape index: {}]
  %s2 = inlined_call_operand.vmem [shape: f32[1,128], index: 2, kind: input, shape index: {}]
  %s3 = inlined_call_operand.hbm [shape: bf16[128,128], index: 3, kind: input, shape index: {}]
  %s4 = inlined_call_operand.vmem [shape: f32[1,128], index: 4, kind: input, shape index: {}]
  %s5 = inlined_call_operand.vmem [shape: f32[1,128], index: 5, kind: input, shape index: {}]
  %s6 = inlined_call_operand.<no memory space> [shape: f32[1,1], index: 6, kind: input, shape index: {}]
  %s7 = inlined_call_operand.hbm [shape: f32[1,16], index: 7, kind: output, shape index: {}]
  %s8 = sld [smem:[#allocation0]]
  $region50: #{sentiment_fnn_forward.1} parent=0
    _
  %s10 = ssub.s32 1, %s8
  %s11 = scalar_select 0, %s10, %s8
  %v12 = vstv %s6
  %13 = vst [vmem:[#allocation2] sm:$0x1] %v12
  $region1: #{sentiment_fnn_forward.1} parent=0
    #allocation3 [shape = 'u8[32768]{0}', space=vmem, size = 0x8000, scoped, tag = 'input window, operand 0, single buffered']
    #allocation4 [shape = 's32[1]{0}', space=sflag, size = 0x4, scoped, tag = 'scoped memory for sentiment_fnn_forward.1']
    #allocation5 [shape = 's32[1]{0}', space=sflag, size = 0x4, scoped, tag = 'scoped memory for sentiment_fnn_forward.1']
    #allocation6 [shape = 'u8[131072]{0}', space=vmem, size = 0x20000, scoped, tag = 'input window, operand 1, single buffered']
    #allocation7 [shape = 's32[1]{0}', space=sflag, size = 0x4, scoped, tag = 'scoped memory for sentiment_fnn_forward.1']
    #allocation8 [shape = 'u8[32768]{0}', space=vmem, size = 0x8000, scoped, tag = 'input window, operand 3, single buffered']
    #allocation9 [shape = 'u8[512]{0}', space=vmem, size = 0x400, scoped, tag = 'output window, operand 0, single buffered']
    %14 = vsyncpa [#allocation4], 0
    %15 = vsyncpa [#allocation7], 0
    %16 = vsyncpa [#allocation5], 0
    // Predicated region
    $region2: #{sentiment_fnn_forward.1} parent=1 // pred_check
      _
    $region3: #{sentiment_fnn_forward.1} parent=1 // pred_check_branch
      %18 = sbr.rel (0) target = $region5
    $region4: #{sentiment_fnn_forward.1} parent=1 // pred_region
      %s20 = ssub.s32 1024, 1024
      %21 = vsyncadd [#allocation4], %s20
      %s22 = sshll.u32 [#allocation3], 4
      %s23 = int_to_ptr.vmem [resolvable:$true] %s22
      %28 = dma.hbm_to_vmem [thread:$0]  %s0, 1024, %s23, [#allocation4], 512, 512, 32
    $region5: #{sentiment_fnn_forward.1} parent=1 // pred_fallthru
      _
    // Predicated region
    $region6: #{sentiment_fnn_forward.1} parent=1 // pred_check
      _
    $region7: #{sentiment_fnn_forward.1} parent=1 // pred_check_branch
      %30 = sbr.rel (0) target = $region9
    $region8: #{sentiment_fnn_forward.1} parent=1 // pred_region
      %s32 = ssub.s32 4096, 4096
      %33 = vsyncadd [#allocation7], %s32
      %s34 = sshll.u32 [#allocation6], 4
      %s35 = int_to_ptr.vmem [resolvable:$true] %s34
      %40 = dma.hbm_to_vmem [thread:$0]  %s1, 4096, %s35, [#allocation7], 64, 64, 4
    $region9: #{sentiment_fnn_forward.1} parent=1 // pred_fallthru
      _
    // Predicated region
    $region10: #{sentiment_fnn_forward.1} parent=1 // pred_check
      _
    $region11: #{sentiment_fnn_forward.1} parent=1 // pred_check_branch
      %42 = sbr.rel (0) target = $region13
    $region12: #{sentiment_fnn_forward.1} parent=1 // pred_region
      _
    $region13: #{sentiment_fnn_forward.1} parent=1 // pred_fallthru
      _
    // Predicated region
    $region14: #{sentiment_fnn_forward.1} parent=1 // pred_check
      _
    $region15: #{sentiment_fnn_forward.1} parent=1 // pred_check_branch
      %44 = sbr.rel (0) target = $region17
    $region16: #{sentiment_fnn_forward.1} parent=1 // pred_region
      %s46 = ssub.s32 1024, 1024
      %47 = vsyncadd [#allocation7], %s46
      %s48 = sshll.u32 [#allocation8], 4
      %s49 = int_to_ptr.vmem [resolvable:$true] %s48
      %54 = dma.hbm_to_vmem [thread:$0]  %s3, 1024, %s49, [#allocation7], 64, 64, 4
    $region17: #{sentiment_fnn_forward.1} parent=1 // pred_fallthru
      _
    // Predicated region
    $region18: #{sentiment_fnn_forward.1} parent=1 // pred_check
      _
    $region19: #{sentiment_fnn_forward.1} parent=1 // pred_check_branch
      %56 = sbr.rel (0) target = $region21
    $region20: #{sentiment_fnn_forward.1} parent=1 // pred_region
      _
    $region21: #{sentiment_fnn_forward.1} parent=1 // pred_fallthru
      _
    // Predicated region
    $region22: #{sentiment_fnn_forward.1} parent=1 // pred_check
      _
    $region23: #{sentiment_fnn_forward.1} parent=1 // pred_check_branch
      %58 = sbr.rel (0) target = $region25
    $region24: #{sentiment_fnn_forward.1} parent=1 // pred_region
      _
    $region25: #{sentiment_fnn_forward.1} parent=1 // pred_fallthru
      _
    // Predicated region
    $region26: #{sentiment_fnn_forward.1} parent=1 // pred_check
      _
    $region27: #{sentiment_fnn_forward.1} parent=1 // pred_check_branch
      %60 = sbr.rel (0) target = $region29
    $region28: #{sentiment_fnn_forward.1} parent=1 // pred_region
      _
    $region29: #{sentiment_fnn_forward.1} parent=1 // pred_fallthru
      _
    // Predicated region
    $region30: #{sentiment_fnn_forward.1} parent=1 // pred_check
      _
    $region31: #{sentiment_fnn_forward.1} parent=1 // pred_check_branch
      %62 = sbr.rel (0) target = $region33
    $region32: #{sentiment_fnn_forward.1} parent=1 // pred_region
      %63 = dma.done [#allocation4], 1024
    $region33: #{sentiment_fnn_forward.1} parent=1 // pred_fallthru
      _
    // Predicated region
    $region34: #{sentiment_fnn_forward.1} parent=1 // pred_check
      _
    $region35: #{sentiment_fnn_forward.1} parent=1 // pred_check_branch
      %65 = sbr.rel (0) target = $region37
    $region36: #{sentiment_fnn_forward.1} parent=1 // pred_region
      %66 = dma.done [#allocation7], 4096
    $region37: #{sentiment_fnn_forward.1} parent=1 // pred_fallthru
      _
    // Predicated region
    $region38: #{sentiment_fnn_forward.1} parent=1 // pred_check
      _
    $region39: #{sentiment_fnn_forward.1} parent=1 // pred_check_branch
      %68 = sbr.rel (0) target = $region41
    $region40: #{sentiment_fnn_forward.1} parent=1 // pred_region
      %69 = dma.done [#allocation7], 1024
    $region41: #{sentiment_fnn_forward.1} parent=1 // pred_fallthru
      _
    %v71 = vld [vmem:[#allocation3] sm:$0xff]
    %v72 = vld [vmem:[#allocation3 + $0x8] sm:$0xff]
    %v73 = vld [vmem:[#allocation3 + $0x10] sm:$0xff]
    %v74 = vld [vmem:[#allocation3 + $0x18] sm:$0xff]
    %v75 = vld [vmem:[#allocation3 + $0x20] sm:$0xff]
    %v76 = vld [vmem:[#allocation3 + $0x28] sm:$0xff]
    %v77 = vld [vmem:[#allocation3 + $0x30] sm:$0xff]
    %v78 = vld [vmem:[#allocation3 + $0x38] sm:$0xff]
    %v79 = vpack.c.bf16 %v75, %v71
    %v80 = vpack.c.bf16 %v76, %v72
    %v81 = vpack.c.bf16 %v77, %v73
    %v82 = vpack.c.bf16 %v78, %v74
    %v83 = vld [vmem:[#allocation6] sm:$0xf]
    %v84 = vld [vmem:[#allocation6 + $0x4] sm:$0xf]
    %v85 = vld [vmem:[#allocation6 + $0x8] sm:$0xf]
    %v86 = vld [vmem:[#allocation6 + $0xc] sm:$0xf]
    %v87 = vld [vmem:[#allocation6 + $0x10] sm:$0xf]
    %v88 = vld [vmem:[#allocation6 + $0x14] sm:$0xf]
    %v89 = vld [vmem:[#allocation6 + $0x18] sm:$0xf]
    %v90 = vld [vmem:[#allocation6 + $0x1c] sm:$0xf]
    %v91 = vld [vmem:[#allocation6 + $0x20] sm:$0xf]
    %v92 = vld [vmem:[#allocation6 + $0x24] sm:$0xf]
    %v93 = vld [vmem:[#allocation6 + $0x28] sm:$0xf]
    %v94 = vld [vmem:[#allocation6 + $0x2c] sm:$0xf]
    %v95 = vld [vmem:[#allocation6 + $0x30] sm:$0xf]
    %v96 = vld [vmem:[#allocation6 + $0x34] sm:$0xf]
    %v97 = vld [vmem:[#allocation6 + $0x38] sm:$0xf]
    %v98 = vld [vmem:[#allocation6 + $0x3c] sm:$0xf]
    %v99 = vld [vmem:[#allocation6 + $0x40] sm:$0xf]
    %v100 = vld [vmem:[#allocation6 + $0x44] sm:$0xf]
    %v101 = vld [vmem:[#allocation6 + $0x48] sm:$0xf]
    %v102 = vld [vmem:[#allocation6 + $0x4c] sm:$0xf]
    %v103 = vld [vmem:[#allocation6 + $0x50] sm:$0xf]
    %v104 = vld [vmem:[#allocation6 + $0x54] sm:$0xf]
    %v105 = vld [vmem:[#allocation6 + $0x58] sm:$0xf]
    %v106 = vld [vmem:[#allocation6 + $0x5c] sm:$0xf]
    %v107 = vld [vmem:[#allocation6 + $0x60] sm:$0xf]
    %v108 = vld [vmem:[#allocation6 + $0x64] sm:$0xf]
    %v109 = vld [vmem:[#allocation6 + $0x68] sm:$0xf]
    %v110 = vld [vmem:[#allocation6 + $0x6c] sm:$0xf]
    %v111 = vld [vmem:[#allocation6 + $0x70] sm:$0xf]
    %v112 = vld [vmem:[#allocation6 + $0x74] sm:$0xf]
    %v113 = vld [vmem:[#allocation6 + $0x78] sm:$0xf]
    %v114 = vld [vmem:[#allocation6 + $0x7c] sm:$0xf]
    %v115 = vld [vmem:[#allocation6 + $0x80] sm:$0xf]
    %v116 = vld [vmem:[#allocation6 + $0x84] sm:$0xf]
    %v117 = vld [vmem:[#allocation6 + $0x88] sm:$0xf]
    %v118 = vld [vmem:[#allocation6 + $0x8c] sm:$0xf]
    %v119 = vld [vmem:[#allocation6 + $0x90] sm:$0xf]
    %v120 = vld [vmem:[#allocation6 + $0x94] sm:$0xf]
    %v121 = vld [vmem:[#allocation6 + $0x98] sm:$0xf]
    %v122 = vld [vmem:[#allocation6 + $0x9c] sm:$0xf]
    %v123 = vld [vmem:[#allocation6 + $0xa0] sm:$0xf]
    %v124 = vld [vmem:[#allocation6 + $0xa4] sm:$0xf]
    %v125 = vld [vmem:[#allocation6 + $0xa8] sm:$0xf]
    %v126 = vld [vmem:[#allocation6 + $0xac] sm:$0xf]
    %v127 = vld [vmem:[#allocation6 + $0xb0] sm:$0xf]
    %v128 = vld [vmem:[#allocation6 + $0xb4] sm:$0xf]
    %v129 = vld [vmem:[#allocation6 + $0xb8] sm:$0xf]
    %v130 = vld [vmem:[#allocation6 + $0xbc] sm:$0xf]
    %v131 = vld [vmem:[#allocation6 + $0xc0] sm:$0xf]
    %v132 = vld [vmem:[#allocation6 + $0xc4] sm:$0xf]
    %v133 = vld [vmem:[#allocation6 + $0xc8] sm:$0xf]
    %v134 = vld [vmem:[#allocation6 + $0xcc] sm:$0xf]
    %v135 = vld [vmem:[#allocation6 + $0xd0] sm:$0xf]
    %v136 = vld [vmem:[#allocation6 + $0xd4] sm:$0xf]
    %v137 = vld [vmem:[#allocation6 + $0xd8] sm:$0xf]
    %v138 = vld [vmem:[#allocation6 + $0xdc] sm:$0xf]
    %v139 = vld [vmem:[#allocation6 + $0xe0] sm:$0xf]
    %v140 = vld [vmem:[#allocation6 + $0xe4] sm:$0xf]
    %v141 = vld [vmem:[#allocation6 + $0xe8] sm:$0xf]
    %v142 = vld [vmem:[#allocation6 + $0xec] sm:$0xf]
    %v143 = vld [vmem:[#allocation6 + $0xf0] sm:$0xf]
    %v144 = vld [vmem:[#allocation6 + $0xf4] sm:$0xf]
    %v145 = vld [vmem:[#allocation6 + $0xf8] sm:$0xf]
    %v146 = vld [vmem:[#allocation6 + $0xfc] sm:$0xf]
    %v147 = vld [vmem:[%s2] sm:$0x1]
    %v149 = vlaneseq
    %v150 = vshrl.u32 %v149, 7
    %v151 = vsub.s32 0, %v150
    %v152 = vrot.slane %v147, %v151
    %v218 = vunpack.c.l.b16 %v83
    %v219 = vunpack.c.l.b16 %v84
    %v220 = vunpack.c.l.b16 %v85
    %v221 = vunpack.c.l.b16 %v86
    %v222 = vunpack.c.l.b16 %v87
    %v223 = vunpack.c.l.b16 %v88
    %v224 = vunpack.c.l.b16 %v89
    %v225 = vunpack.c.l.b16 %v90
    %v226 = vunpack.c.l.b16 %v91
    %v227 = vunpack.c.l.b16 %v92
    %v228 = vunpack.c.l.b16 %v93
    %v229 = vunpack.c.l.b16 %v94
    %v230 = vunpack.c.l.b16 %v95
    %v231 = vunpack.c.l.b16 %v96
    %v232 = vunpack.c.l.b16 %v97
    %v233 = vunpack.c.l.b16 %v98
    %v234 = vunpack.c.l.b16 %v99
    %v235 = vunpack.c.l.b16 %v100
    %v236 = vunpack.c.l.b16 %v101
    %v237 = vunpack.c.l.b16 %v102
    %v238 = vunpack.c.l.b16 %v103
    %v239 = vunpack.c.l.b16 %v104
    %v240 = vunpack.c.l.b16 %v105
    %v241 = vunpack.c.l.b16 %v106
    %v242 = vunpack.c.l.b16 %v107
    %v243 = vunpack.c.l.b16 %v108
    %v244 = vunpack.c.l.b16 %v109
    %v245 = vunpack.c.l.b16 %v110
    %v246 = vunpack.c.l.b16 %v111
    %v247 = vunpack.c.l.b16 %v112
    %v248 = vunpack.c.l.b16 %v113
    %v249 = vunpack.c.l.b16 %v114
    %v250 = vunpack.c.l.b16 %v115
    %v251 = vunpack.c.l.b16 %v116
    %v252 = vunpack.c.l.b16 %v117
    %v253 = vunpack.c.l.b16 %v118
    %v254 = vunpack.c.l.b16 %v119
    %v255 = vunpack.c.l.b16 %v120
    %v256 = vunpack.c.l.b16 %v121
    %v257 = vunpack.c.l.b16 %v122
    %v258 = vunpack.c.l.b16 %v123
    %v259 = vunpack.c.l.b16 %v124
    %v260 = vunpack.c.l.b16 %v125
    %v261 = vunpack.c.l.b16 %v126
    %v262 = vunpack.c.l.b16 %v127
    %v263 = vunpack.c.l.b16 %v128
    %v264 = vunpack.c.l.b16 %v129
    %v265 = vunpack.c.l.b16 %v130
    %v266 = vunpack.c.l.b16 %v131
    %v267 = vunpack.c.l.b16 %v132
    %v268 = vunpack.c.l.b16 %v133
    %v269 = vunpack.c.l.b16 %v134
    %v270 = vunpack.c.l.b16 %v135
    %v271 = vunpack.c.l.b16 %v136
    %v272 = vunpack.c.l.b16 %v137
    %v273 = vunpack.c.l.b16 %v138
    %v274 = vunpack.c.l.b16 %v139
    %v275 = vunpack.c.l.b16 %v140
    %v276 = vunpack.c.l.b16 %v141
    %v277 = vunpack.c.l.b16 %v142
    %v278 = vunpack.c.l.b16 %v143
    %v279 = vunpack.c.l.b16 %v144
    %v280 = vunpack.c.l.b16 %v145
    %v281 = vunpack.c.l.b16 %v146
    %v282 = vpack.c.b16 %v219, %v218
    %v283 = vpack.c.b16 %v221, %v220
    %v284 = vpack.c.b16 %v223, %v222
    %v285 = vpack.c.b16 %v225, %v224
    %v286 = vpack.c.b16 %v227, %v226
    %v287 = vpack.c.b16 %v229, %v228
    %v288 = vpack.c.b16 %v231, %v230
    %v289 = vpack.c.b16 %v233, %v232
    %v290 = vpack.c.b16 %v235, %v234
    %v291 = vpack.c.b16 %v237, %v236
    %v292 = vpack.c.b16 %v239, %v238
    %v293 = vpack.c.b16 %v241, %v240
    %v294 = vpack.c.b16 %v243, %v242
    %v295 = vpack.c.b16 %v245, %v244
    %v296 = vpack.c.b16 %v247, %v246
    %v297 = vpack.c.b16 %v249, %v248
    %v298 = vpack.c.b16 %v251, %v250
    %v299 = vpack.c.b16 %v253, %v252
    %v300 = vpack.c.b16 %v255, %v254
    %v301 = vpack.c.b16 %v257, %v256
    %v302 = vpack.c.b16 %v259, %v258
    %v303 = vpack.c.b16 %v261, %v260
    %v304 = vpack.c.b16 %v263, %v262
    %v305 = vpack.c.b16 %v265, %v264
    %v306 = vpack.c.b16 %v267, %v266
    %v307 = vpack.c.b16 %v269, %v268
    %v308 = vpack.c.b16 %v271, %v270
    %v309 = vpack.c.b16 %v273, %v272
    %v310 = vpack.c.b16 %v275, %v274
    %v311 = vpack.c.b16 %v277, %v276
    %v312 = vpack.c.b16 %v279, %v278
    %v313 = vpack.c.b16 %v281, %v280
    %346 = vmatprep.subr.bf16.mxu0 0
    %347 = vmatpush1.bf16.msra.mxu0 %v282
    %348 = vmatprep.subr.bf16.mxu0 0
    %349 = vmatpush1.bf16.msra.mxu0 %v283
    %350 = vmatprep.subr.bf16.mxu0 0
    %351 = vmatpush1.bf16.msra.mxu0 %v284
    %352 = vmatprep.subr.bf16.mxu0 0
    %353 = vmatpush1.bf16.msra.mxu0 %v285
    %354 = vmatprep.subr.bf16.mxu0 0
    %355 = vmatpush1.bf16.msra.mxu0 %v286
    %356 = vmatprep.subr.bf16.mxu0 0
    %357 = vmatpush1.bf16.msra.mxu0 %v287
    %358 = vmatprep.subr.bf16.mxu0 0
    %359 = vmatpush1.bf16.msra.mxu0 %v288
    %360 = vmatprep.subr.bf16.mxu0 0
    %361 = vmatpush1.bf16.msra.mxu0 %v289
    %362 = vmatprep.subr.bf16.mxu0 0
    %363 = vmatpush1.bf16.msra.mxu0 %v290
    %364 = vmatprep.subr.bf16.mxu0 0
    %365 = vmatpush1.bf16.msra.mxu0 %v291
    %366 = vmatprep.subr.bf16.mxu0 0
    %367 = vmatpush1.bf16.msra.mxu0 %v292
    %368 = vmatprep.subr.bf16.mxu0 0
    %369 = vmatpush1.bf16.msra.mxu0 %v293
    %370 = vmatprep.subr.bf16.mxu0 0
    %371 = vmatpush1.bf16.msra.mxu0 %v294
    %372 = vmatprep.subr.bf16.mxu0 0
    %373 = vmatpush1.bf16.msra.mxu0 %v295
    %374 = vmatprep.subr.bf16.mxu0 0
    %375 = vmatpush1.bf16.msra.mxu0 %v296
    %376 = vmatprep.subr.bf16.mxu0 0
    %377 = vmatpush1.bf16.msra.mxu0 %v297
    %378 = vmatprep.mubr.bf16.mxu0 %v80
    %379 = vmatmul.mubr.bf16.gmra.mrb[0].mxu0 %v79
    %v380 = vpop.f32.mrb[0].mxu0
    %v381 = vadd.f32 %v152, %v380
    %v382 = vpop.f32.mrb[0].mxu0
    %v383 = vpop.f32.mrb[0].mxu0
    %v384 = vadd.f32 %v152, %v383
    %v385 = vpop.f32.mrb[0].mxu0
    %386 = vdwg.mxu0
    %387 = vmatprep.subr.bf16.mxu0 0
    %388 = vmatpush1.bf16.msra.mxu0 %v298
    %389 = vmatprep.subr.bf16.mxu0 0
    %390 = vmatpush1.bf16.msra.mxu0 %v299
    %391 = vmatprep.subr.bf16.mxu0 0
    %392 = vmatpush1.bf16.msra.mxu0 %v300
    %393 = vmatprep.subr.bf16.mxu0 0
    %394 = vmatpush1.bf16.msra.mxu0 %v301
    %395 = vmatprep.subr.bf16.mxu0 0
    %396 = vmatpush1.bf16.msra.mxu0 %v302
    %397 = vmatprep.subr.bf16.mxu0 0
    %398 = vmatpush1.bf16.msra.mxu0 %v303
    %399 = vmatprep.subr.bf16.mxu0 0
    %400 = vmatpush1.bf16.msra.mxu0 %v304
    %401 = vmatprep.subr.bf16.mxu0 0
    %402 = vmatpush1.bf16.msra.mxu0 %v305
    %403 = vmatprep.subr.bf16.mxu0 0
    %404 = vmatpush1.bf16.msra.mxu0 %v306
    %405 = vmatprep.subr.bf16.mxu0 0
    %406 = vmatpush1.bf16.msra.mxu0 %v307
    %407 = vmatprep.subr.bf16.mxu0 0
    %408 = vmatpush1.bf16.msra.mxu0 %v308
    %409 = vmatprep.subr.bf16.mxu0 0
    %410 = vmatpush1.bf16.msra.mxu0 %v309
    %411 = vmatprep.subr.bf16.mxu0 0
    %412 = vmatpush1.bf16.msra.mxu0 %v310
    %413 = vmatprep.subr.bf16.mxu0 0
    %414 = vmatpush1.bf16.msra.mxu0 %v311
    %415 = vmatprep.subr.bf16.mxu0 0
    %416 = vmatpush1.bf16.msra.mxu0 %v312
    %417 = vmatprep.subr.bf16.mxu0 0
    %418 = vmatpush1.bf16.msra.mxu0 %v313
    %419 = vmatprep.mubr.bf16.mxu0 %v82
    %420 = vmatmul.mubr.bf16.gmra.mrb[0].mxu0 %v81
    %v421 = vpop.f32.mrb[0].mxu0
    %v422 = vadd.f32 %v381, %v421
    %v423 = vpop.f32.mrb[0].mxu0
    %v424 = vpop.f32.mrb[0].mxu0
    %v425 = vadd.f32 %v384, %v424
    %v426 = vpop.f32.mrb[0].mxu0
    %427 = vdwg.mxu0
    %v428 = vmax.f32 %v422, 0.0
    %v429 = vmax.f32 %v425, 0.0
    %v430 = vpack.c.bf16 %v429, %v428
    %v431 = vld [vmem:[#allocation8] sm:$0xf]
    %v432 = vld [vmem:[#allocation8 + $0x4] sm:$0xf]
    %v433 = vld [vmem:[#allocation8 + $0x8] sm:$0xf]
    %v434 = vld [vmem:[#allocation8 + $0xc] sm:$0xf]
    %v435 = vld [vmem:[#allocation8 + $0x10] sm:$0xf]
    %v436 = vld [vmem:[#allocation8 + $0x14] sm:$0xf]
    %v437 = vld [vmem:[#allocation8 + $0x18] sm:$0xf]
    %v438 = vld [vmem:[#allocation8 + $0x1c] sm:$0xf]
    %v439 = vld [vmem:[#allocation8 + $0x20] sm:$0xf]
    %v440 = vld [vmem:[#allocation8 + $0x24] sm:$0xf]
    %v441 = vld [vmem:[#allocation8 + $0x28] sm:$0xf]
    %v442 = vld [vmem:[#allocation8 + $0x2c] sm:$0xf]
    %v443 = vld [vmem:[#allocation8 + $0x30] sm:$0xf]
    %v444 = vld [vmem:[#allocation8 + $0x34] sm:$0xf]
    %v445 = vld [vmem:[#allocation8 + $0x38] sm:$0xf]
    %v446 = vld [vmem:[#allocation8 + $0x3c] sm:$0xf]
    %v447 = vld [vmem:[%s4] sm:$0x1]
    %v449 = vlaneseq
    %v450 = vshrl.u32 %v449, 7
    %v451 = vsub.s32 0, %v450
    %v452 = vrot.slane %v447, %v451
    %v470 = vunpack.c.l.b16 %v431
    %v471 = vunpack.c.l.b16 %v432
    %v472 = vunpack.c.l.b16 %v433
    %v473 = vunpack.c.l.b16 %v434
    %v474 = vunpack.c.l.b16 %v435
    %v475 = vunpack.c.l.b16 %v436
    %v476 = vunpack.c.l.b16 %v437
    %v477 = vunpack.c.l.b16 %v438
    %v478 = vunpack.c.l.b16 %v439
    %v479 = vunpack.c.l.b16 %v440
    %v480 = vunpack.c.l.b16 %v441
    %v481 = vunpack.c.l.b16 %v442
    %v482 = vunpack.c.l.b16 %v443
    %v483 = vunpack.c.l.b16 %v444
    %v484 = vunpack.c.l.b16 %v445
    %v485 = vunpack.c.l.b16 %v446
    %v486 = vpack.c.b16 %v471, %v470
    %v487 = vpack.c.b16 %v473, %v472
    %v488 = vpack.c.b16 %v475, %v474
    %v489 = vpack.c.b16 %v477, %v476
    %v490 = vpack.c.b16 %v479, %v478
    %v491 = vpack.c.b16 %v481, %v480
    %v492 = vpack.c.b16 %v483, %v482
    %v493 = vpack.c.b16 %v485, %v484
    %502 = vmatprep.subr.bf16.mxu0 0
    %503 = vmatpush1.bf16.msra.mxu0 %v486
    %504 = vmatprep.subr.bf16.mxu0 0
    %505 = vmatpush1.bf16.msra.mxu0 %v487
    %506 = vmatprep.subr.bf16.mxu0 0
    %507 = vmatpush1.bf16.msra.mxu0 %v488
    %508 = vmatprep.subr.bf16.mxu0 0
    %509 = vmatpush1.bf16.msra.mxu0 %v489
    %510 = vmatprep.subr.bf16.mxu0 0
    %511 = vmatpush1.bf16.msra.mxu0 %v490
    %512 = vmatprep.subr.bf16.mxu0 0
    %513 = vmatpush1.bf16.msra.mxu0 %v491
    %514 = vmatprep.subr.bf16.mxu0 0
    %515 = vmatpush1.bf16.msra.mxu0 %v492
    %516 = vmatprep.subr.bf16.mxu0 0
    %517 = vmatpush1.bf16.msra.mxu0 %v493
    %518 = vmatprep.subr.bf16.mxu0 0
    %519 = vmatpush1.bf16.msra.mxu0 0
    %520 = vmatprep.subr.bf16.mxu0 0
    %521 = vmatpush1.bf16.msra.mxu0 0
    %522 = vmatprep.subr.bf16.mxu0 0
    %523 = vmatpush1.bf16.msra.mxu0 0
    %524 = vmatprep.subr.bf16.mxu0 0
    %525 = vmatpush1.bf16.msra.mxu0 0
    %526 = vmatprep.subr.bf16.mxu0 0
    %527 = vmatpush1.bf16.msra.mxu0 0
    %528 = vmatprep.subr.bf16.mxu0 0
    %529 = vmatpush1.bf16.msra.mxu0 0
    %530 = vmatprep.subr.bf16.mxu0 0
    %531 = vmatpush1.bf16.msra.mxu0 0
    %532 = vmatprep.subr.bf16.mxu0 0
    %533 = vmatpush1.bf16.msra.mxu0 0
    %534 = vmatprep.mubr.bf16.mxu0 0
    %535 = vmatmul.mubr.bf16.gmra.mrb[0].mxu0 %v430
    %v536 = vpop.f32.mrb[0].mxu0
    %v537 = vadd.f32 %v452, %v536
    %v538 = vpop.f32.mrb[0].mxu0
    %v539 = vpop.f32.mrb[0].mxu0
    %v540 = vadd.f32 %v452, %v539
    %v541 = vpop.f32.mrb[0].mxu0
    %542 = vdwg.mxu0
    %v543 = vmax.f32 %v537, 0.0
    %v544 = vmax.f32 %v540, 0.0
    %v545 = vld [vmem:[%s5] sm:$0x1]
    %v546 = vld [vmem:[#allocation2] sm:$0x1]
    %548 = vset.pattern.permute.xlu0 0
    %549 = vperm.xlu0 %548, %v546
    %v550 = vpop.permute.xlu0 %549
    %v552 = vlaneseq
    %v553 = vshrl.u32 %v552, 7
    %v554 = vsub.s32 0, %v553
    %v555 = vrot.slane %v550, %v554
    %556 = vmatprep.subr.mxu0 0.0
    %557 = vmatpush1.xpose.msra.mxu0 %v543
    %558 = vmatprep.subr.mxu0 0.0
    %559 = vmatpush1.xpose.msra.mxu0 %v544
    %560 = vmatprep.subr.mxu0 0.0
    %561 = vmatpush1.xpose.msra.mxu0 0.0
    %562 = vmatprep.subr.mxu0 0.0
    %563 = vmatpush1.xpose.msra.mxu0 0.0
    %564 = vmatprep.subr.mxu0 0.0
    %565 = vmatpush1.xpose.msra.mxu0 0.0
    %566 = vmatprep.subr.mxu0 0.0
    %567 = vmatpush1.xpose.msra.mxu0 0.0
    %568 = vmatprep.subr.mxu0 0.0
    %569 = vmatpush1.xpose.msra.mxu0 0.0
    %570 = vmatprep.subr.mxu0 0.0
    %571 = vmatpush1.xpose.msra.mxu0 0.0
    %572 = vmatprep.subr.mxu0 0.0
    %573 = vmatpush1.xpose.msra.mxu0 0.0
    %574 = vmatprep.subr.mxu0 0.0
    %575 = vmatpush1.xpose.msra.mxu0 0.0
    %576 = vmatprep.subr.mxu0 0.0
    %577 = vmatpush1.xpose.msra.mxu0 0.0
    %578 = vmatprep.subr.mxu0 0.0
    %579 = vmatpush1.xpose.msra.mxu0 0.0
    %580 = vmatprep.subr.mxu0 0.0
    %581 = vmatpush1.xpose.msra.mxu0 0.0
    %582 = vmatprep.subr.mxu0 0.0
    %583 = vmatpush1.xpose.msra.mxu0 0.0
    %584 = vmatprep.subr.mxu0 0.0
    %585 = vmatpush1.xpose.msra.mxu0 0.0
    %586 = vmatprep.subr.mxu0 0.0
    %587 = vmatpush1.xpose.msra.mxu0 0.0
    %588 = vmatprep.subr.mxu0 0.0
    %589 = vmatpush1.xpose.msra.mxu0 0.0
    %590 = vmatprep.subr.mxu0 0.0
    %591 = vmatpush1.xpose.msra.mxu0 0.0
    %592 = vmatprep.subr.mxu0 0.0
    %593 = vmatpush1.xpose.msra.mxu0 0.0
    %594 = vmatprep.subr.mxu0 0.0
    %595 = vmatpush1.xpose.msra.mxu0 0.0
    %596 = vmatprep.subr.mxu0 0.0
    %597 = vmatpush1.xpose.msra.mxu0 0.0
    %598 = vmatprep.subr.mxu0 0.0
    %599 = vmatpush1.xpose.msra.mxu0 0.0
    %600 = vmatprep.subr.mxu0 0.0
    %601 = vmatpush1.xpose.msra.mxu0 0.0
    %602 = vmatprep.subr.mxu0 0.0
    %603 = vmatpush1.xpose.msra.mxu0 0.0
    %604 = vmatprep.subr.mxu0 0.0
    %605 = vmatpush1.xpose.msra.mxu0 0.0
    %606 = vmatprep.subr.mxu0 0.0
    %607 = vmatpush1.xpose.msra.mxu0 0.0
    %608 = vmatprep.subr.mxu0 0.0
    %609 = vmatpush1.xpose.msra.mxu0 0.0
    %610 = vmatprep.subr.mxu0 0.0
    %611 = vmatpush1.xpose.msra.mxu0 0.0
    %612 = vmatprep.subr.mxu0 0.0
    %613 = vmatpush1.xpose.msra.mxu0 0.0
    %614 = vmatprep.subr.mxu0 0.0
    %615 = vmatpush1.xpose.msra.mxu0 0.0
    %616 = vmatprep.subr.mxu0 0.0
    %617 = vmatpush1.xpose.msra.mxu0 0.0
    %618 = vmatprep.subr.mxu0 0.0
    %619 = vmatpush1.xpose.msra.mxu0 0.0
    %620 = vmatprep.mubr.f32.mxu0 0.0
    %621 = vmatmul.mubr.f32.gmra.mrb[0].mxu0 %v545
    %v622 = vpop.f32.mrb[0].mxu0
    %v623 = vadd.f32 %v555, %v622
    %v624 = vpop.f32.mrb[0].mxu0
    %625 = vdwg.mxu0
    %v626 = vsub.f32 0.0, %v623
    %v627 = vmul.f32 %v626, 1.442695
    %v628 = vpow.pop %v627
    %v629 = vadd.f32 %v628, 1.0
    %v630 = vrcp.pop %v629
    %v631 = vmul.f32 1.0, %v630
    %vm632 = vcmask 122880
    %633 = vst.msk [vmem:[#allocation9] sm:$0x1] %vm632, %v631
    // Predicated region
    $region42: #{sentiment_fnn_forward.1} parent=1 // pred_check
      _
    $region43: #{sentiment_fnn_forward.1} parent=1 // pred_check_branch
      %635 = sbr.rel (0) target = $region45
    $region44: #{sentiment_fnn_forward.1} parent=1 // pred_region
      %s637 = ssub.s32 16, 16
      %638 = vsyncadd [#allocation5], %s637
      %s640 = sshll.u32 [#allocation9], 4
      %s641 = int_to_ptr.vmem [resolvable:$true] %s640
      %643 = dma.vmem_to_hbm [thread:$0]  %s641, 16, %s7, [#allocation5]
    $region45: #{sentiment_fnn_forward.1} parent=1 // pred_fallthru
      _
    // Predicated region
    $region46: #{sentiment_fnn_forward.1} parent=1 // pred_check
      _
    $region47: #{sentiment_fnn_forward.1} parent=1 // pred_check_branch
      %645 = sbr.rel (0) target = $region49
    $region48: #{sentiment_fnn_forward.1} parent=1 // pred_region
      %646 = dma.done [#allocation5], 16
    $region49: #{sentiment_fnn_forward.1} parent=1 // pred_fallthru
      _
    %647 = vsyncpa [#allocation4], 1
    %648 = vsyncpa [#allocation7], 1
    %649 = vsyncpa [#allocation5], 1

</llo_original>
